<compile_context>
chip_gen: v7x
topology: tpu7x:2x2x1
jax: 0.10.0
libtpu: 0.0.40
codegen_flags: <defaults>
</compile_context>

<pallas_src>
import jax
import jax.numpy as jnp
from jax.experimental import pallas as pl
from jax.experimental.pallas import tpu as pltpu


def _attn_kernel(q_ref, v_ref, ctx_ref, attn_ref):
    # q_ref: (TQ, H), v_ref: (S, H) VMEM tiles in native dtype (batch dim squeezed).
    q = q_ref[...]
    v = v_ref[...]

    # f32 inputs: force true-f32 matmul passes so the kernel matches an f32
    # reference; bf16 inputs keep the default (full-rate) MXU path.
    prec = jax.lax.Precision.HIGHEST if q.dtype == jnp.float32 else None

    # score = q @ v^T -> (TQ, S); f32 accumulation on the MXU.
    score = jax.lax.dot_general(
        q, v, (((1,), (1,)), ((), ())),
        preferred_element_type=jnp.float32, precision=prec)

    # numerically stable softmax over S (matches F.softmax semantics), math in f32.
    m = jnp.max(score, axis=-1, keepdims=True)
    e = jnp.exp(score - m)
    # TODO(synk): for small H on v6e/v7x the single EUP can bind on this exp; the
    # flash-style S-tiled restructure (see _pick_q_tile TODO) shrinks per-tile exp
    # batches; keep f32 exp on v5e (no bf16 EUP).
    denom = jnp.sum(e, axis=-1, keepdims=True)
    inv = pl.reciprocal(denom, approx=False)        # exact: one (TQ,1) divide

    # Materialize attn ONCE in the output dtype and reuse it for both the store and
    # the second matmul (no separate f32 attn temporary, no second cast pass).
    attn_lo = (e * inv).astype(attn_ref.dtype)
    attn_ref[...] = attn_lo

    # context = attn @ v -> (TQ, H); f32 accumulation.
    ctx = jnp.dot(attn_lo.astype(v.dtype), v,
                  preferred_element_type=jnp.float32, precision=prec)
    ctx_ref[...] = ctx.astype(ctx_ref.dtype)


def _vmem_budgets():
    """(per-step tile budget, scoped vmem_limit cap), derived from the chip."""
    try:
        cap = pltpu.get_tpu_info().vmem_capacity_bytes
    except Exception:
        cap = 64 << 20  # conservative (v7x-sized) fallback
    tile_budget = min(int(0.42 * cap), 40 << 20)   # ~27 MiB on v7x, 40 MiB on v5e/v6e
    limit_cap = min(int(0.62 * cap), 48 << 20)     # ~40 MiB on v7x, 48 MiB on v5e/v6e
    return tile_budget, limit_cap


def _working_set(tq, S, H, in_bytes, out_bytes):
    """Approximate per-grid-step VMEM working set (double-buffered tiles + temps)."""
    return (
        2 * tq * H * in_bytes        # q tile, double buffered
        + 2 * S * H * in_bytes       # value tile, double buffered
        + 2 * tq * H * out_bytes     # ctx tile, double buffered
        + 2 * tq * S * out_bytes     # attn tile, double buffered
        + 2 * tq * S * 4             # f32 score / exp temporaries
        + tq * S * out_bytes         # attn in output dtype
    )


def _pick_q_tile(B, Q, S, H, in_bytes, out_bytes, budget):
    """Largest Q tile (128-aligned preferred, 8-aligned otherwise) that divides Q
    and fits the VMEM budget; never falls back to a LARGER tile than what fits."""
    candidates = [tq for tq in (512, 256, 128) if Q % tq == 0]
    candidates += [tq for tq in range(120, 0, -8) if Q % tq == 0]
    if not candidates:
        candidates = [Q]  # full-extent block is always a legal block shape

    tq = next((t for t in candidates
               if _working_set(t, S, H, in_bytes, out_bytes) <= budget),
              candidates[-1])
    # TODO(synk): if even the smallest divisor exceeds the budget (very large S),
    # restructure with an S ("arbitrary") grid axis + flash-style online softmax and
    # a second normalization pass so the full attn matrix can still be emitted.

    # v7x has 2 TensorCores per chip: for B == 1 prefer >= 2 parallel Q tiles.
    if B == 1 and Q // tq < 2:
        half = (tq // 2) - ((tq // 2) % 8)
        alt = next((t for t in range(half, 7, -8) if Q % t == 0), None)
        if alt is not None:
            tq = alt
    return tq


def dot_product_attention(query: jax.Array, value: jax.Array):
    """query: (B, Q, H), value: (B, S, H) -> (context (B,Q,H), attn (B,Q,S))"""
    B, Q, H = query.shape
    Bv, S, Hv = value.shape
    assert B == Bv and H == Hv

    in_bytes = jnp.dtype(query.dtype).itemsize
    out_bytes = in_bytes  # outputs inherit input dtype (bf16 in -> bf16 attn/ctx)

    tile_budget, limit_cap = _vmem_budgets()
    TQ = _pick_q_tile(B, Q, S, H, in_bytes, out_bytes, tile_budget)
    grid = (B, Q // TQ)

    ws = _working_set(TQ, S, H, in_bytes, out_bytes)
    vmem_limit = int(min(max(int(1.5 * ws), 16 << 20), limit_cap))

    cost = pl.CostEstimate(
        flops=4 * B * Q * S * H,                  # two matmuls
        transcendentals=B * Q * S + B * Q,        # exp + exact reciprocal
        bytes_accessed=(B * Q * H + B * S * H) * in_bytes
                       + (B * Q * H + B * Q * S) * out_bytes,
    )

    out_shapes = (
        jax.ShapeDtypeStruct((B, Q, H), query.dtype),  # context
        jax.ShapeDtypeStruct((B, Q, S), query.dtype),  # attn
    )

    return pl.pallas_call(
        _attn_kernel,
        out_shape=out_shapes,
        grid_spec=pltpu.PrefetchScalarGridSpec(
            num_scalar_prefetch=0,
            grid=grid,
            in_specs=[
                pl.BlockSpec((pl.Squeezed(), TQ, H), lambda b, i: (b, i, 0)),
                # constant in i -> value tile stays resident across Q tiles (no re-DMA).
                # TODO(synk): pipeline_mode=pl.Buffered(1) (or a manual per-batch DMA)
                # would reclaim the second S*H buffer, which matters on v7x's 64 MiB.
                pl.BlockSpec((pl.Squeezed(), S, H), lambda b, i: (b, 0, 0)),
            ],
            out_specs=[
                # TODO(synk): H < 128 gives masked partial ctx stores; folding heads
                # into the lane axis needs a layout change outside this module.
                pl.BlockSpec((pl.Squeezed(), TQ, H), lambda b, i: (b, i, 0)),
                pl.BlockSpec((pl.Squeezed(), TQ, S), lambda b, i: (b, i, 0)),
            ],
        ),
        compiler_params=pltpu.CompilerParams(
            dimension_semantics=("parallel", "parallel"),
            vmem_limit_bytes=vmem_limit,
        ),
        cost_estimate=cost,
    )(query, value)


def _reference(query, value):
    # True-f32 reference (TPU default matmul precision is bf16-grade otherwise).
    score = jnp.einsum("bqh,bsh->bqs", query, value,
                       precision=jax.lax.Precision.HIGHEST)
    attn = jax.nn.softmax(score, axis=-1)
    context = jnp.einsum("bqs,bsh->bqh", attn, value,
                         precision=jax.lax.Precision.HIGHEST)
    return context, attn


if __name__ == "__main__":
    # Small deterministic example: batch=2, query_len=8, seq_len=16, hidden=32
    key = jax.random.PRNGKey(0)
    kq, kv = jax.random.split(key)
    B, Q, S, H = 2, 8, 16, 32
    query = jax.random.normal(kq, (B, Q, H), dtype=jnp.float32)
    value = jax.random.normal(kv, (B, S, H), dtype=jnp.float32)

    context, attn = dot_product_attention(query, value)
    jax.block_until_ready((context, attn))

    ref_ctx, ref_attn = _reference(query, value)
    assert jnp.allclose(attn, ref_attn, atol=2e-3, rtol=2e-3), "attn mismatch"
    assert jnp.allclose(context, ref_ctx, atol=2e-3, rtol=2e-3), "context mismatch"

    print("KERNEL_OK")
</pallas_src>

<mosaic_0001>
module attributes {stable_mosaic.version = 11 : i64} {
  func.func @_attn_kernel(%arg0: i32, %arg1: i32, %arg2: memref<1x8x32xf32, #tpu.memory_space<vmem>>, %arg3: memref<1x16x32xf32, #tpu.memory_space<vmem>>, %arg4: memref<1x8x32xf32, #tpu.memory_space<vmem>>, %arg5: memref<1x8x16xf32, #tpu.memory_space<vmem>>) attributes {dimension_semantics = [#tpu.dimension_semantics<parallel>, #tpu.dimension_semantics<parallel>], iteration_bounds = array<i64: 2, 1>, scalar_prefetch = 0 : i64, scratch_operands = 0 : i64, tpu.core_type = #tpu.core_type<tc>, window_params = [{transform_indices = @transform_0, window_bounds = array<i64: 1, 8, 32>}, {transform_indices = @transform_1, window_bounds = array<i64: 1, 16, 32>}, {transform_indices = @transform_2, window_bounds = array<i64: 1, 8, 32>}, {transform_indices = @transform_3, window_bounds = array<i64: 1, 8, 16>}]} {
    %c0 = arith.constant 0 : index
    %c0_0 = arith.constant 0 : index
    %c0_1 = arith.constant 0 : index
    %0 = vector.load %arg2[%c0, %c0_0, %c0_1] : memref<1x8x32xf32, #tpu.memory_space<vmem>>, vector<1x8x32xf32>
    %1 = vector.shape_cast %0 : vector<1x8x32xf32> to vector<8x32xf32>
    %c0_2 = arith.constant 0 : index
    %c0_3 = arith.constant 0 : index
    %c0_4 = arith.constant 0 : index
    %2 = vector.load %arg3[%c0_2, %c0_3, %c0_4] : memref<1x16x32xf32, #tpu.memory_space<vmem>>, vector<1x16x32xf32>
    %3 = vector.shape_cast %2 : vector<1x16x32xf32> to vector<16x32xf32>
    %cst = arith.constant dense<0.000000e+00> : vector<8x16xf32>
    %4 = tpu.matmul %1, %3, %cst {dimension_numbers = #tpu.dot_dimension_numbers<[1], [1], [0], [0], [0, 0, 1, 0], [], []>, precision = #tpu.contract_precision<fp32>} : vector<8x32xf32>, vector<16x32xf32>, vector<8x16xf32> -> vector<8x16xf32>
    %cst_5 = arith.constant dense<0xFF800000> : vector<8xf32>
    %5 = vector.multi_reduction <maximumf>, %4, %cst_5 [1] : vector<8x16xf32> to vector<8xf32>
    %6 = vector.shape_cast %5 : vector<8xf32> to vector<8x1xf32>
    %7 = vector.broadcast %6 : vector<8x1xf32> to vector<8x16xf32>
    %8 = arith.subf %4, %7 : vector<8x16xf32>
    %9 = math.exp %8 : vector<8x16xf32>
    %cst_6 = arith.constant dense<0.000000e+00> : vector<8xf32>
    %10 = vector.multi_reduction <add>, %9, %cst_6 [1] : vector<8x16xf32> to vector<8xf32>
    %11 = vector.shape_cast %10 : vector<8xf32> to vector<8x1xf32>
    %12 = tpu.reciprocal %11 : vector<8x1xf32> -> vector<8x1xf32>
    %13 = vector.broadcast %12 : vector<8x1xf32> to vector<8x16xf32>
    %14 = arith.mulf %9, %13 : vector<8x16xf32>
    %c0_7 = arith.constant 0 : index
    %c0_8 = arith.constant 0 : index
    %c0_9 = arith.constant 0 : index
    %15 = vector.load %arg5[%c0_7, %c0_8, %c0_9] : memref<1x8x16xf32, #tpu.memory_space<vmem>>, vector<1x8x16xf32>
    %16 = vector.shape_cast %15 : vector<1x8x16xf32> to vector<8x16xf32>
    %17 = vector.shape_cast %14 : vector<8x16xf32> to vector<1x8x16xf32>
    tpu.vector_store %arg5[%c0_7, %c0_8, %c0_9], %17 {strides = array<i32>} : memref<1x8x16xf32, #tpu.memory_space<vmem>>, vector<1x8x16xf32>,
    %cst_10 = arith.constant dense<0.000000e+00> : vector<8x32xf32>
    %18 = tpu.matmul %14, %3, %cst_10 {dimension_numbers = #tpu.dot_dimension_numbers<[1], [0], [0], [1], [0, 0, 1, 1], [], []>, precision = #tpu.contract_precision<fp32>} : vector<8x16xf32>, vector<16x32xf32>, vector<8x32xf32> -> vector<8x32xf32>
    %c0_11 = arith.constant 0 : index
    %c0_12 = arith.constant 0 : index
    %c0_13 = arith.constant 0 : index
    %19 = vector.load %arg4[%c0_11, %c0_12, %c0_13] : memref<1x8x32xf32, #tpu.memory_space<vmem>>, vector<1x8x32xf32>
    %20 = vector.shape_cast %19 : vector<1x8x32xf32> to vector<8x32xf32>
    %21 = vector.shape_cast %18 : vector<8x32xf32> to vector<1x8x32xf32>
    tpu.vector_store %arg4[%c0_11, %c0_12, %c0_13], %21 {strides = array<i32>} : memref<1x8x32xf32, #tpu.memory_space<vmem>>, vector<1x8x32xf32>,
    return
  }
  func.func @transform_0(%arg0: i32, %arg1: i32) -> (i32, i32, i32) {
    %c0_i32 = arith.constant 0 : i32
    %c0_i32_0 = arith.constant 0 : i32
    return %arg0, %arg1, %c0_i32 : i32, i32, i32
  }
  func.func @transform_1(%arg0: i32, %arg1: i32) -> (i32, i32, i32) {
    %c0_i32 = arith.constant 0 : i32
    %c0_i32_0 = arith.constant 0 : i32
    %c0_i32_1 = arith.constant 0 : i32
    return %arg0, %c0_i32, %c0_i32_0 : i32, i32, i32
  }
  func.func @transform_2(%arg0: i32, %arg1: i32) -> (i32, i32, i32) {
    %c0_i32 = arith.constant 0 : i32
    %c0_i32_0 = arith.constant 0 : i32
    return %arg0, %arg1, %c0_i32 : i32, i32, i32
  }
  func.func @transform_3(%arg0: i32, %arg1: i32) -> (i32, i32, i32) {
    %c0_i32 = arith.constant 0 : i32
    %c0_i32_0 = arith.constant 0 : i32
    return %arg0, %arg1, %c0_i32 : i32, i32, i32
  }
}

</mosaic_0001>

<llo_original>
// kernel: tpu_custom_call.1
$region0: #{tpu_custom_call.1}
  #allocation0 [shape = 'u32[]', space=smem, size = 0x4, offset = 0x4, fixed_abs, tag = 'smem constant byte address 0x4 - core index']
  #allocation1 [shape = 'u32[144,128]{1,0:T(1,128)}', space=vmem, size = 0x12000, scoped, tag = 'internal scratch']
  %s0 = inlined_call_operand.hbm [shape: f32[2,8,32], index: 0, kind: input, shape index: {}]
  %s1 = inlined_call_operand.hbm [shape: f32[2,16,32], index: 1, kind: input, shape index: {}]
  %s2 = inlined_call_operand.hbm [shape: f32[2,8,32], index: 2, kind: output, shape index: {0}]
  %s3 = inlined_call_operand.hbm [shape: f32[2,8,16], index: 3, kind: output, shape index: {1}]
  %4 = xla_tuple %s2, %s3
  %s5 = sld [smem:[#allocation0]]
  $region57: #{tpu_custom_call.1} parent=0
    _
  %s7 = ssub.s32 1, %s5
  %s8 = scalar_select 0, %s7, %s5
  $region1: #{tpu_custom_call.1} parent=0
    #allocation2 [shape = 'u8[8192]{0}', space=vmem, size = 0x2000, scoped, tag = 'input window, operand 0']
    #allocation3 [shape = 's32[2]{0}', space=sflag, size = 0x8, scoped, tag = 'scoped memory for tpu_custom_call.1']
    #allocation4 [shape = 's32[2]{0}', space=sflag, size = 0x8, scoped, tag = 'scoped memory for tpu_custom_call.1']
    #allocation5 [shape = 'u8[16384]{0}', space=vmem, size = 0x4000, scoped, tag = 'input window, operand 1']
    #allocation6 [shape = 's32[2]{0}', space=sflag, size = 0x8, scoped, tag = 'scoped memory for tpu_custom_call.1']
    #allocation7 [shape = 'u8[8192]{0}', space=vmem, size = 0x2000, scoped, tag = 'output window, operand 0']
    #allocation8 [shape = 'u8[8192]{0}', space=vmem, size = 0x2000, scoped, tag = 'output window, operand 1']
    #allocation9 [shape = 's32[2]{0}', space=sflag, size = 0x8, scoped, tag = 'scoped memory for tpu_custom_call.1']
    %9 = vsyncpa [#allocation3], 0
    %s10 = scalar_lea.sflag [#allocation3], 1
    %11 = vsyncpa %s10, 0
    %12 = vsyncpa [#allocation6], 0
    %s13 = scalar_lea.sflag [#allocation6], 1
    %14 = vsyncpa %s13, 0
    %15 = vsyncpa [#allocation4], 0
    %s16 = scalar_lea.sflag [#allocation4], 1
    %17 = vsyncpa %s16, 0
    %18 = vsyncpa [#allocation9], 0
    %s19 = scalar_lea.sflag [#allocation9], 1
    %20 = vsyncpa %s19, 0
    loop: start=0, step=1, limit=4
    $region2: #{tpu_custom_call.1} parent=1 // loop_pre_header
      _
    $region3: #{tpu_custom_call.1} parent=1 // loop_header
      %s22 = sphi 0, %s26
      %p23 = scmp.ge.s32.totalorder %s22, 4
      %s29 = sphi 0, %s41
      %s30 = sphi 0, %s37
      %s31 = sphi 0, %s29
      %s32 = sphi 0, %s30
      %s33 = sphi 0, %s31
      %s34 = sphi 0, %s32
      %s46 = sphi 0, %s48
      %s49 = sphi 0, %s46
      %s50 = sphi 0, %s49
      %s66 = sphi 0, %s50
      %s72 = sphi 0, %s74
      %s75 = sphi 0, %s72
      %s76 = sphi 0, %s75
      %s92 = sphi 0, %s76
      %s100 = sphi 0, %s102
      %s103 = sphi 0, %s100
      %s104 = sphi 0, %s103
      %s120 = sphi 0, %s104
      %s128 = sphi 0, %s130
      %s131 = sphi 0, %s128
      %s132 = sphi 0, %s131
      %s148 = sphi 0, %s132
    $region4: #{tpu_custom_call.1} parent=1 // loop_header_branch
      %25 = sbr.rel (%p23) target = $region8
    $region5: #{tpu_custom_call.1} parent=1 // loop_body
      %s27 = ssub.s32 %s22, 1
      %s28 = ssub.s32 %s22, 2
      %s35 = sadd.s32 1, %s30
      %p36 = scmp.ge.s32.totalorder %s35, 1
      %s37 = scalar_select %p36, 0, %s35
      %s38 = sadd.s32 1, %s29
      %s39 = scalar_select %p36, %s38, %s29
      %p40 = scmp.ge.s32.totalorder %s39, 2
      %s41 = scalar_select %p40, 0, %s39
      %s42 = ssub.s32 %s29, %s41
      %s43 = ssub.s32 %s30, %s37
      %s44 = sor.u32 %s42, %s43
      %p45 = scmp.eq.s32.totalorder %s44, 0
      %s47 = sadd.s32 %s46, 1
      %s48 = scalar_select %p45, %s46, %s47
      %p51 = pneg %p45
      %p52 = scmp.eq.s32.totalorder %s22, 1
      %p53 = por %p51, %p52
      %p54 = scmp.ne.s32.totalorder %s46, %s49
      %p55 = scmp.eq.s32.totalorder %s22, 0
      %p56 = por %p54, %p55
      %p57 = scmp.ne.s32.totalorder %s46, %s49
      %p58 = scmp.eq.s32.totalorder %s27, 1
      %p59 = por %p57, %p58
      %p60 = scmp.ne.s32.totalorder %s49, %s50
      %p61 = scmp.eq.s32.totalorder %s27, 0
      %p62 = por %p60, %p61
      %p63 = scmp.ne.s32.totalorder %s49, %s50
      %p64 = scmp.eq.s32.totalorder %s28, 1
      %p65 = por %p63, %p64
      %p67 = scmp.ne.s32.totalorder %s50, %s66
      %p68 = scmp.eq.s32.totalorder %s28, 0
      %p69 = por %p67, %p68
      %s70 = ssub.s32 %s29, %s41
      %p71 = scmp.eq.s32.totalorder %s70, 0
      %s73 = sadd.s32 %s72, 1
      %s74 = scalar_select %p71, %s72, %s73
      %p77 = pneg %p71
      %p78 = scmp.eq.s32.totalorder %s22, 1
      %p79 = por %p77, %p78
      %p80 = scmp.ne.s32.totalorder %s72, %s75
      %p81 = scmp.eq.s32.totalorder %s22, 0
      %p82 = por %p80, %p81
      %p83 = scmp.ne.s32.totalorder %s72, %s75
      %p84 = scmp.eq.s32.totalorder %s27, 1
      %p85 = por %p83, %p84
      %p86 = scmp.ne.s32.totalorder %s75, %s76
      %p87 = scmp.eq.s32.totalorder %s27, 0
      %p88 = por %p86, %p87
      %p89 = scmp.ne.s32.totalorder %s75, %s76
      %p90 = scmp.eq.s32.totalorder %s28, 1
      %p91 = por %p89, %p90
      %p93 = scmp.ne.s32.totalorder %s76, %s92
      %p94 = scmp.eq.s32.totalorder %s28, 0
      %p95 = por %p93, %p94
      %s96 = ssub.s32 %s29, %s41
      %s97 = ssub.s32 %s30, %s37
      %s98 = sor.u32 %s96, %s97
      %p99 = scmp.eq.s32.totalorder %s98, 0
      %s101 = sadd.s32 %s100, 1
      %s102 = scalar_select %p99, %s100, %s101
      %p105 = pneg %p99
      %p106 = scmp.eq.s32.totalorder %s22, 1
      %p107 = por %p105, %p106
      %p108 = scmp.ne.s32.totalorder %s100, %s103
      %p109 = scmp.eq.s32.totalorder %s22, 0
      %p110 = por %p108, %p109
      %p111 = scmp.ne.s32.totalorder %s100, %s103
      %p112 = scmp.eq.s32.totalorder %s27, 1
      %p113 = por %p111, %p112
      %p114 = scmp.ne.s32.totalorder %s103, %s104
      %p115 = scmp.eq.s32.totalorder %s27, 0
      %p116 = por %p114, %p115
      %p117 = scmp.ne.s32.totalorder %s103, %s104
      %p118 = scmp.eq.s32.totalorder %s28, 1
      %p119 = por %p117, %p118
      %p121 = scmp.ne.s32.totalorder %s104, %s120
      %p122 = scmp.eq.s32.totalorder %s28, 0
      %p123 = por %p121, %p122
      %s124 = ssub.s32 %s29, %s41
      %s125 = ssub.s32 %s30, %s37
      %s126 = sor.u32 %s124, %s125
      %p127 = scmp.eq.s32.totalorder %s126, 0
      %s129 = sadd.s32 %s128, 1
      %s130 = scalar_select %p127, %s128, %s129
      %p133 = pneg %p127
      %p134 = scmp.eq.s32.totalorder %s22, 1
      %p135 = por %p133, %p134
      %p136 = scmp.ne.s32.totalorder %s128, %s131
      %p137 = scmp.eq.s32.totalorder %s22, 0
      %p138 = por %p136, %p137
      %p139 = scmp.ne.s32.totalorder %s128, %s131
      %p140 = scmp.eq.s32.totalorder %s27, 1
      %p141 = por %p139, %p140
      %p142 = scmp.ne.s32.totalorder %s131, %s132
      %p143 = scmp.eq.s32.totalorder %s27, 0
      %p144 = por %p142, %p143
      %p145 = scmp.ne.s32.totalorder %s131, %s132
      %p146 = scmp.eq.s32.totalorder %s28, 1
      %p147 = por %p145, %p146
      %p149 = scmp.ne.s32.totalorder %s132, %s148
      %p150 = scmp.eq.s32.totalorder %s28, 0
      %p151 = por %p149, %p150
      %p152 = scmp.le.s32.totalorder 1, %s22
      %p153 = scmp.lt.s32.totalorder %s22, 3
      %p154 = pnand %p152, %p153
      %p155 = pneg %p154
      // Predicated region
      $region9: #{tpu_custom_call.1} parent=5 // pred_check
        _
      $region10: #{tpu_custom_call.1} parent=5 // pred_check_branch
        %157 = sbr.rel (%p154) target = $region12
      $region11: #{tpu_custom_call.1} parent=5 // pred_region
        %s158 = ssub.s32 %s22, 1
      $region12: #{tpu_custom_call.1} parent=5 // pred_fallthru
        _
      %p159 = scmp.lt.s32.totalorder %s22, 2
      // Predicated region
      $region13: #{tpu_custom_call.1} parent=5 // pred_check
        %p160 = pneg %p159
      $region14: #{tpu_custom_call.1} parent=5 // pred_check_branch
        %162 = sbr.rel (%p160) target = $region16
      $region15: #{tpu_custom_call.1} parent=5 // pred_region
        // Predicated region
        $region17: #{tpu_custom_call.1} parent=15 // pred_check
          %p163 = pneg %p56
        $region18: #{tpu_custom_call.1} parent=15 // pred_check_branch
          %165 = sbr.rel (%p163) target = $region20
        $region19: #{tpu_custom_call.1} parent=15 // pred_region
          %s166 = sand.u32 %s46, 1
          %s167 = scalar_lea.sflag [#allocation3], %s166
          %s168 = sand.u32 %s46, 1
          %s169 = smul.addr %s168, 8
          %s170 = scalar_lea.vmem [#allocation2], %s169
          %s172 = ssub.s32 128, 128
          %173 = vsyncadd %s167, %s172
          %s174 = sadd.s32 %s30, %s29
          %s175 = smul.addr %s174, 128
          %s176 = scalar_lea.hbm %s0, %s175
          %s178 = sshll.u32 %s170, 4
          %s179 = int_to_ptr.vmem [resolvable:$true] %s178
          %181 = dma.hbm_to_vmem [thread:$0]  %s176, 128, %s179, %s167
        $region20: #{tpu_custom_call.1} parent=15 // pred_fallthru
          _
        // Predicated region
        $region21: #{tpu_custom_call.1} parent=15 // pred_check
          %p182 = pneg %p82
        $region22: #{tpu_custom_call.1} parent=15 // pred_check_branch
          %184 = sbr.rel (%p182) target = $region24
        $region23: #{tpu_custom_call.1} parent=15 // pred_region
          %s185 = sand.u32 %s72, 1
          %s186 = scalar_lea.sflag [#allocation6], %s185
          %s187 = sand.u32 %s72, 1
          %s188 = smul.addr %s187, 16
          %s189 = scalar_lea.vmem [#allocation5], %s188
          %s191 = ssub.s32 256, 256
          %192 = vsyncadd %s186, %s191
          %s193 = smul.addr %s29, 2
          %s194 = smul.addr %s193, 128
          %s195 = scalar_lea.hbm %s1, %s194
          %s196 = sshll.u32 %s189, 4
          %s197 = int_to_ptr.vmem [resolvable:$true] %s196
          %202 = dma.hbm_to_vmem [thread:$0]  %s195, 256, %s197, %s186, 128, 128, 8
        $region24: #{tpu_custom_call.1} parent=15 // pred_fallthru
          _
      $region16: #{tpu_custom_call.1} parent=5 // pred_fallthru
        _
      %p203 = scmp.le.s32.totalorder 1, %s22
      %p204 = scmp.lt.s32.totalorder %s22, 3
      %p205 = pnand %p203, %p204
      %p206 = pneg %p205
      // Predicated region
      $region25: #{tpu_custom_call.1} parent=5 // pred_check
        _
      $region26: #{tpu_custom_call.1} parent=5 // pred_check_branch
        %208 = sbr.rel (%p205) target = $region28
      $region27: #{tpu_custom_call.1} parent=5 // pred_region
        %s209 = ssub.s32 %s22, 1
        %s210 = sand.u32 %s49, 1
        %s211 = scalar_lea.sflag [#allocation3], %s210
        %s212 = sand.u32 %s49, 1
        %s213 = smul.addr %s212, 8
        %s214 = scalar_lea.vmem [#allocation2], %s213
        // Predicated region
        $region29: #{tpu_custom_call.1} parent=27 // pred_check
          %p215 = pneg %p62
        $region30: #{tpu_custom_call.1} parent=27 // pred_check_branch
          %217 = sbr.rel (%p215) target = $region32
        $region31: #{tpu_custom_call.1} parent=27 // pred_region
          %218 = dma.done %s211, 128
        $region32: #{tpu_custom_call.1} parent=27 // pred_fallthru
          _
        %s219 = sand.u32 %s75, 1
        %s220 = scalar_lea.sflag [#allocation6], %s219
        %s221 = sand.u32 %s75, 1
        %s222 = smul.addr %s221, 16
        %s223 = scalar_lea.vmem [#allocation5], %s222
        // Predicated region
        $region33: #{tpu_custom_call.1} parent=27 // pred_check
          %p224 = pneg %p88
        $region34: #{tpu_custom_call.1} parent=27 // pred_check_branch
          %226 = sbr.rel (%p224) target = $region36
        $region35: #{tpu_custom_call.1} parent=27 // pred_region
          %227 = dma.done %s220, 256
        $region36: #{tpu_custom_call.1} parent=27 // pred_fallthru
          _
        %s228 = sand.u32 %s49, 1
        %s229 = scalar_lea.sflag [#allocation3], %s228
        %s230 = sand.u32 %s49, 1
        %s231 = smul.addr %s230, 8
        %s232 = scalar_lea.vmem [#allocation2], %s231
        %p233 = pneg %p62
        %p234 = pneg %p59
        %s235 = sand.u32 %s75, 1
        %s236 = scalar_lea.sflag [#allocation6], %s235
        %s237 = sand.u32 %s75, 1
        %s238 = smul.addr %s237, 16
        %s239 = scalar_lea.vmem [#allocation5], %s238
        %p240 = pneg %p88
        %p241 = pneg %p85
        %p242 = pneg %p116
        %p243 = pneg %p113
        %s244 = sand.u32 %s103, 1
        %s245 = scalar_lea.sflag [#allocation4], %s244
        %s246 = sand.u32 %s103, 1
        %s247 = smul.addr %s246, 8
        %s248 = scalar_lea.vmem [#allocation7], %s247
        %p249 = pneg %p144
        %p250 = pneg %p141
        %s251 = sand.u32 %s131, 1
        %s252 = scalar_lea.sflag [#allocation9], %s251
        %s253 = sand.u32 %s131, 1
        %s254 = smul.addr %s253, 8
        %s255 = scalar_lea.vmem [#allocation8], %s254
        %v256 = vld [vmem:[%s214] sm:$0xff]
        %v257 = vld [vmem:[%s223] sm:$0xff]
        %v258 = vld [vmem:[%s223 + $0x8] sm:$0xff]
        %vm259 = vcmask 261120
        %v261 = vsel %vm259, %v256, 0
        %v264 = vsel %vm259, %v257, 0
        %v267 = vsel %vm259, %v258, 0
        %269 = vmatprep.subr.mxu0 0.0
        %v270 = vand.u32 %v264, 4294901760
        %271 = vmatpush1.xpose.msra.mxu0 %v270
        %272 = vmatprep.subr.mxu0 0.0
        %v273 = vand.u32 %v267, 4294901760
        %274 = vmatpush1.xpose.msra.mxu0 %v273
        %275 = vmatprep.subr.mxu0 0.0
        %276 = vmatpush1.xpose.msra.mxu0 0.0
        %277 = vmatprep.subr.mxu0 0.0
        %278 = vmatpush1.xpose.msra.mxu0 0.0
        %279 = vmatprep.subr.mxu0 0.0
        %280 = vmatpush1.xpose.msra.mxu0 0.0
        %281 = vmatprep.subr.mxu0 0.0
        %282 = vmatpush1.xpose.msra.mxu0 0.0
        %283 = vmatprep.subr.mxu0 0.0
        %284 = vmatpush1.xpose.msra.mxu0 0.0
        %285 = vmatprep.subr.mxu0 0.0
        %286 = vmatpush1.xpose.msra.mxu0 0.0
        %287 = vmatprep.subr.mxu0 0.0
        %288 = vmatpush1.xpose.msra.mxu0 0.0
        %289 = vmatprep.subr.mxu0 0.0
        %290 = vmatpush1.xpose.msra.mxu0 0.0
        %291 = vmatprep.subr.mxu0 0.0
        %292 = vmatpush1.xpose.msra.mxu0 0.0
        %293 = vmatprep.subr.mxu0 0.0
        %294 = vmatpush1.xpose.msra.mxu0 0.0
        %295 = vmatprep.subr.mxu0 0.0
        %296 = vmatpush1.xpose.msra.mxu0 0.0
        %297 = vmatprep.subr.mxu0 0.0
        %298 = vmatpush1.xpose.msra.mxu0 0.0
        %299 = vmatprep.subr.mxu0 0.0
        %300 = vmatpush1.xpose.msra.mxu0 0.0
        %301 = vmatprep.subr.mxu0 0.0
        %302 = vmatpush1.xpose.msra.mxu0 0.0
        %303 = vmatprep.subr.mxu0 0.0
        %304 = vmatpush1.xpose.msra.mxu0 0.0
        %305 = vmatprep.subr.mxu0 0.0
        %306 = vmatpush1.xpose.msra.mxu0 0.0
        %307 = vmatprep.subr.mxu0 0.0
        %308 = vmatpush1.xpose.msra.mxu0 0.0
        %309 = vmatprep.subr.mxu0 0.0
        %310 = vmatpush1.xpose.msra.mxu0 0.0
        %311 = vmatprep.subr.mxu0 0.0
        %312 = vmatpush1.xpose.msra.mxu0 0.0
        %313 = vmatprep.subr.mxu0 0.0
        %314 = vmatpush1.xpose.msra.mxu0 0.0
        %315 = vmatprep.subr.mxu0 0.0
        %316 = vmatpush1.xpose.msra.mxu0 0.0
        %317 = vmatprep.subr.mxu0 0.0
        %318 = vmatpush1.xpose.msra.mxu0 0.0
        %319 = vmatprep.subr.mxu0 0.0
        %320 = vmatpush1.xpose.msra.mxu0 0.0
        %321 = vmatprep.subr.mxu0 0.0
        %322 = vmatpush1.xpose.msra.mxu0 0.0
        %323 = vmatprep.subr.mxu0 0.0
        %324 = vmatpush1.xpose.msra.mxu0 0.0
        %325 = vmatprep.subr.mxu0 0.0
        %326 = vmatpush1.xpose.msra.mxu0 0.0
        %327 = vmatprep.subr.mxu0 0.0
        %328 = vmatpush1.xpose.msra.mxu0 0.0
        %329 = vmatprep.subr.mxu0 0.0
        %330 = vmatpush1.xpose.msra.mxu0 0.0
        %331 = vmatprep.subr.mxu0 0.0
        %332 = vmatpush1.xpose.msra.mxu0 0.0
        %333 = vmatprep.subr.mxu0 0.0
        %334 = vmatpush1.xpose.msra.mxu0 0.0
        %335 = vmatprep.mubr.f32.mxu0 0.0
        %v336 = vand.u32 %v261, 4294901760
        %v337 = vsub.f32 %v261, %v336
        %v338 = vand.u32 %v337, 4294901760
        %v339 = vsub.f32 %v337, %v338
        %v340 = vand.u32 %v339, 4294901760
        %341 = vmatmul.mubr.f32.gmra.mrb[0].mxu0 %v340
        %v342 = vpop.f32.mrb[0].mxu0
        %v343 = vadd.f32 0.0, %v342
        %v344 = vpop.f32.mrb[0].mxu0
        %345 = vdwg.mxu0
        %346 = vmatprep.subr.mxu0 0.0
        %v347 = vand.u32 %v264, 4294901760
        %v348 = vsub.f32 %v264, %v347
        %v349 = vand.u32 %v348, 4294901760
        %v350 = vsub.f32 %v348, %v349
        %v351 = vand.u32 %v350, 4294901760
        %352 = vmatpush1.xpose.msra.mxu0 %v351
        %353 = vmatprep.subr.mxu0 0.0
        %v354 = vand.u32 %v267, 4294901760
        %v355 = vsub.f32 %v267, %v354
        %v356 = vand.u32 %v355, 4294901760
        %v357 = vsub.f32 %v355, %v356
        %v358 = vand.u32 %v357, 4294901760
        %359 = vmatpush1.xpose.msra.mxu0 %v358
        %360 = vmatprep.subr.mxu0 0.0
        %361 = vmatpush1.xpose.msra.mxu0 0.0
        %362 = vmatprep.subr.mxu0 0.0
        %363 = vmatpush1.xpose.msra.mxu0 0.0
        %364 = vmatprep.subr.mxu0 0.0
        %365 = vmatpush1.xpose.msra.mxu0 0.0
        %366 = vmatprep.subr.mxu0 0.0
        %367 = vmatpush1.xpose.msra.mxu0 0.0
        %368 = vmatprep.subr.mxu0 0.0
        %369 = vmatpush1.xpose.msra.mxu0 0.0
        %370 = vmatprep.subr.mxu0 0.0
        %371 = vmatpush1.xpose.msra.mxu0 0.0
        %372 = vmatprep.subr.mxu0 0.0
        %373 = vmatpush1.xpose.msra.mxu0 0.0
        %374 = vmatprep.subr.mxu0 0.0
        %375 = vmatpush1.xpose.msra.mxu0 0.0
        %376 = vmatprep.subr.mxu0 0.0
        %377 = vmatpush1.xpose.msra.mxu0 0.0
        %378 = vmatprep.subr.mxu0 0.0
        %379 = vmatpush1.xpose.msra.mxu0 0.0
        %380 = vmatprep.subr.mxu0 0.0
        %381 = vmatpush1.xpose.msra.mxu0 0.0
        %382 = vmatprep.subr.mxu0 0.0
        %383 = vmatpush1.xpose.msra.mxu0 0.0
        %384 = vmatprep.subr.mxu0 0.0
        %385 = vmatpush1.xpose.msra.mxu0 0.0
        %386 = vmatprep.subr.mxu0 0.0
        %387 = vmatpush1.xpose.msra.mxu0 0.0
        %388 = vmatprep.subr.mxu0 0.0
        %389 = vmatpush1.xpose.msra.mxu0 0.0
        %390 = vmatprep.subr.mxu0 0.0
        %391 = vmatpush1.xpose.msra.mxu0 0.0
        %392 = vmatprep.subr.mxu0 0.0
        %393 = vmatpush1.xpose.msra.mxu0 0.0
        %394 = vmatprep.subr.mxu0 0.0
        %395 = vmatpush1.xpose.msra.mxu0 0.0
        %396 = vmatprep.subr.mxu0 0.0
        %397 = vmatpush1.xpose.msra.mxu0 0.0
        %398 = vmatprep.subr.mxu0 0.0
        %399 = vmatpush1.xpose.msra.mxu0 0.0
        %400 = vmatprep.subr.mxu0 0.0
        %401 = vmatpush1.xpose.msra.mxu0 0.0
        %402 = vmatprep.subr.mxu0 0.0
        %403 = vmatpush1.xpose.msra.mxu0 0.0
        %404 = vmatprep.subr.mxu0 0.0
        %405 = vmatpush1.xpose.msra.mxu0 0.0
        %406 = vmatprep.subr.mxu0 0.0
        %407 = vmatpush1.xpose.msra.mxu0 0.0
        %408 = vmatprep.subr.mxu0 0.0
        %409 = vmatpush1.xpose.msra.mxu0 0.0
        %410 = vmatprep.subr.mxu0 0.0
        %411 = vmatpush1.xpose.msra.mxu0 0.0
        %412 = vmatprep.subr.mxu0 0.0
        %413 = vmatpush1.xpose.msra.mxu0 0.0
        %414 = vmatprep.subr.mxu0 0.0
        %415 = vmatpush1.xpose.msra.mxu0 0.0
        %416 = vmatprep.subr.mxu0 0.0
        %417 = vmatpush1.xpose.msra.mxu0 0.0
        %418 = vmatprep.subr.mxu0 0.0
        %419 = vmatpush1.xpose.msra.mxu0 0.0
        %420 = vmatprep.mubr.f32.mxu0 0.0
        %v421 = vand.u32 %v261, 4294901760
        %422 = vmatmul.mubr.f32.gmra.mrb[0].mxu0 %v421
        %v423 = vpop.f32.mrb[0].mxu0
        %v424 = vadd.f32 %v343, %v423
        %v425 = vpop.f32.mrb[0].mxu0
        %426 = vdwg.mxu0
        %427 = vmatprep.subr.mxu0 0.0
        %v428 = vand.u32 %v264, 4294901760
        %v429 = vsub.f32 %v264, %v428
        %430 = vmatpush1.xpose.msra.mxu0 %v429
        %431 = vmatprep.subr.mxu0 0.0
        %v432 = vand.u32 %v267, 4294901760
        %v433 = vsub.f32 %v267, %v432
        %434 = vmatpush1.xpose.msra.mxu0 %v433
        %435 = vmatprep.subr.mxu0 0.0
        %436 = vmatpush1.xpose.msra.mxu0 0.0
        %437 = vmatprep.subr.mxu0 0.0
        %438 = vmatpush1.xpose.msra.mxu0 0.0
        %439 = vmatprep.subr.mxu0 0.0
        %440 = vmatpush1.xpose.msra.mxu0 0.0
        %441 = vmatprep.subr.mxu0 0.0
        %442 = vmatpush1.xpose.msra.mxu0 0.0
        %443 = vmatprep.subr.mxu0 0.0
        %444 = vmatpush1.xpose.msra.mxu0 0.0
        %445 = vmatprep.subr.mxu0 0.0
        %446 = vmatpush1.xpose.msra.mxu0 0.0
        %447 = vmatprep.subr.mxu0 0.0
        %448 = vmatpush1.xpose.msra.mxu0 0.0
        %449 = vmatprep.subr.mxu0 0.0
        %450 = vmatpush1.xpose.msra.mxu0 0.0
        %451 = vmatprep.subr.mxu0 0.0
        %452 = vmatpush1.xpose.msra.mxu0 0.0
        %453 = vmatprep.subr.mxu0 0.0
        %454 = vmatpush1.xpose.msra.mxu0 0.0
        %455 = vmatprep.subr.mxu0 0.0
        %456 = vmatpush1.xpose.msra.mxu0 0.0
        %457 = vmatprep.subr.mxu0 0.0
        %458 = vmatpush1.xpose.msra.mxu0 0.0
        %459 = vmatprep.subr.mxu0 0.0
        %460 = vmatpush1.xpose.msra.mxu0 0.0
        %461 = vmatprep.subr.mxu0 0.0
        %462 = vmatpush1.xpose.msra.mxu0 0.0
        %463 = vmatprep.subr.mxu0 0.0
        %464 = vmatpush1.xpose.msra.mxu0 0.0
        %465 = vmatprep.subr.mxu0 0.0
        %466 = vmatpush1.xpose.msra.mxu0 0.0
        %467 = vmatprep.subr.mxu0 0.0
        %468 = vmatpush1.xpose.msra.mxu0 0.0
        %469 = vmatprep.subr.mxu0 0.0
        %470 = vmatpush1.xpose.msra.mxu0 0.0
        %471 = vmatprep.subr.mxu0 0.0
        %472 = vmatpush1.xpose.msra.mxu0 0.0
        %473 = vmatprep.subr.mxu0 0.0
        %474 = vmatpush1.xpose.msra.mxu0 0.0
        %475 = vmatprep.subr.mxu0 0.0
        %476 = vmatpush1.xpose.msra.mxu0 0.0
        %477 = vmatprep.subr.mxu0 0.0
        %478 = vmatpush1.xpose.msra.mxu0 0.0
        %479 = vmatprep.subr.mxu0 0.0
        %480 = vmatpush1.xpose.msra.mxu0 0.0
        %481 = vmatprep.subr.mxu0 0.0
        %482 = vmatpush1.xpose.msra.mxu0 0.0
        %483 = vmatprep.subr.mxu0 0.0
        %484 = vmatpush1.xpose.msra.mxu0 0.0
        %485 = vmatprep.subr.mxu0 0.0
        %486 = vmatpush1.xpose.msra.mxu0 0.0
        %487 = vmatprep.subr.mxu0 0.0
        %488 = vmatpush1.xpose.msra.mxu0 0.0
        %489 = vmatprep.subr.mxu0 0.0
        %490 = vmatpush1.xpose.msra.mxu0 0.0
        %491 = vmatprep.subr.mxu0 0.0
        %492 = vmatpush1.xpose.msra.mxu0 0.0
        %493 = vmatprep.subr.mxu0 0.0
        %494 = vmatpush1.xpose.msra.mxu0 0.0
        %495 = vmatprep.mubr.f32.mxu0 0.0
        %v496 = vand.u32 %v261, 4294901760
        %v497 = vsub.f32 %v261, %v496
        %498 = vmatmul.mubr.f32.gmra.mrb[0].mxu0 %v497
        %v499 = vpop.f32.mrb[0].mxu0
        %v500 = vadd.f32 %v424, %v499
        %v501 = vpop.f32.mrb[0].mxu0
        %502 = vdwg.mxu0
        %503 = vmatprep.subr.mxu0 0.0
        %v504 = vand.u32 %v264, 4294901760
        %505 = vmatpush1.xpose.msra.mxu0 %v504
        %506 = vmatprep.subr.mxu0 0.0
        %v507 = vand.u32 %v267, 4294901760
        %508 = vmatpush1.xpose.msra.mxu0 %v507
        %509 = vmatprep.subr.mxu0 0.0
        %510 = vmatpush1.xpose.msra.mxu0 0.0
        %511 = vmatprep.subr.mxu0 0.0
        %512 = vmatpush1.xpose.msra.mxu0 0.0
        %513 = vmatprep.subr.mxu0 0.0
        %514 = vmatpush1.xpose.msra.mxu0 0.0
        %515 = vmatprep.subr.mxu0 0.0
        %516 = vmatpush1.xpose.msra.mxu0 0.0
        %517 = vmatprep.subr.mxu0 0.0
        %518 = vmatpush1.xpose.msra.mxu0 0.0
        %519 = vmatprep.subr.mxu0 0.0
        %520 = vmatpush1.xpose.msra.mxu0 0.0
        %521 = vmatprep.subr.mxu0 0.0
        %522 = vmatpush1.xpose.msra.mxu0 0.0
        %523 = vmatprep.subr.mxu0 0.0
        %524 = vmatpush1.xpose.msra.mxu0 0.0
        %525 = vmatprep.subr.mxu0 0.0
        %526 = vmatpush1.xpose.msra.mxu0 0.0
        %527 = vmatprep.subr.mxu0 0.0
        %528 = vmatpush1.xpose.msra.mxu0 0.0
        %529 = vmatprep.subr.mxu0 0.0
        %530 = vmatpush1.xpose.msra.mxu0 0.0
        %531 = vmatprep.subr.mxu0 0.0
        %532 = vmatpush1.xpose.msra.mxu0 0.0
        %533 = vmatprep.subr.mxu0 0.0
        %534 = vmatpush1.xpose.msra.mxu0 0.0
        %535 = vmatprep.subr.mxu0 0.0
        %536 = vmatpush1.xpose.msra.mxu0 0.0
        %537 = vmatprep.subr.mxu0 0.0
        %538 = vmatpush1.xpose.msra.mxu0 0.0
        %539 = vmatprep.subr.mxu0 0.0
        %540 = vmatpush1.xpose.msra.mxu0 0.0
        %541 = vmatprep.subr.mxu0 0.0
        %542 = vmatpush1.xpose.msra.mxu0 0.0
        %543 = vmatprep.subr.mxu0 0.0
        %544 = vmatpush1.xpose.msra.mxu0 0.0
        %545 = vmatprep.subr.mxu0 0.0
        %546 = vmatpush1.xpose.msra.mxu0 0.0
        %547 = vmatprep.subr.mxu0 0.0
        %548 = vmatpush1.xpose.msra.mxu0 0.0
        %549 = vmatprep.subr.mxu0 0.0
        %550 = vmatpush1.xpose.msra.mxu0 0.0
        %551 = vmatprep.subr.mxu0 0.0
        %552 = vmatpush1.xpose.msra.mxu0 0.0
        %553 = vmatprep.subr.mxu0 0.0
        %554 = vmatpush1.xpose.msra.mxu0 0.0
        %555 = vmatprep.subr.mxu0 0.0
        %556 = vmatpush1.xpose.msra.mxu0 0.0
        %557 = vmatprep.subr.mxu0 0.0
        %558 = vmatpush1.xpose.msra.mxu0 0.0
        %559 = vmatprep.subr.mxu0 0.0
        %560 = vmatpush1.xpose.msra.mxu0 0.0
        %561 = vmatprep.subr.mxu0 0.0
        %562 = vmatpush1.xpose.msra.mxu0 0.0
        %563 = vmatprep.subr.mxu0 0.0
        %564 = vmatpush1.xpose.msra.mxu0 0.0
        %565 = vmatprep.subr.mxu0 0.0
        %566 = vmatpush1.xpose.msra.mxu0 0.0
        %567 = vmatprep.subr.mxu0 0.0
        %568 = vmatpush1.xpose.msra.mxu0 0.0
        %569 = vmatprep.mubr.f32.mxu0 0.0
        %v570 = vand.u32 %v261, 4294901760
        %v571 = vsub.f32 %v261, %v570
        %v572 = vand.u32 %v571, 4294901760
        %573 = vmatmul.mubr.f32.gmra.mrb[0].mxu0 %v572
        %v574 = vpop.f32.mrb[0].mxu0
        %v575 = vadd.f32 %v500, %v574
        %v576 = vpop.f32.mrb[0].mxu0
        %577 = vdwg.mxu0
        %578 = vmatprep.subr.mxu0 0.0
        %v579 = vand.u32 %v264, 4294901760
        %v580 = vsub.f32 %v264, %v579
        %v581 = vand.u32 %v580, 4294901760
        %582 = vmatpush1.xpose.msra.mxu0 %v581
        %583 = vmatprep.subr.mxu0 0.0
        %v584 = vand.u32 %v267, 4294901760
        %v585 = vsub.f32 %v267, %v584
        %v586 = vand.u32 %v585, 4294901760
        %587 = vmatpush1.xpose.msra.mxu0 %v586
        %588 = vmatprep.subr.mxu0 0.0
        %589 = vmatpush1.xpose.msra.mxu0 0.0
        %590 = vmatprep.subr.mxu0 0.0
        %591 = vmatpush1.xpose.msra.mxu0 0.0
        %592 = vmatprep.subr.mxu0 0.0
        %593 = vmatpush1.xpose.msra.mxu0 0.0
        %594 = vmatprep.subr.mxu0 0.0
        %595 = vmatpush1.xpose.msra.mxu0 0.0
        %596 = vmatprep.subr.mxu0 0.0
        %597 = vmatpush1.xpose.msra.mxu0 0.0
        %598 = vmatprep.subr.mxu0 0.0
        %599 = vmatpush1.xpose.msra.mxu0 0.0
        %600 = vmatprep.subr.mxu0 0.0
        %601 = vmatpush1.xpose.msra.mxu0 0.0
        %602 = vmatprep.subr.mxu0 0.0
        %603 = vmatpush1.xpose.msra.mxu0 0.0
        %604 = vmatprep.subr.mxu0 0.0
        %605 = vmatpush1.xpose.msra.mxu0 0.0
        %606 = vmatprep.subr.mxu0 0.0
        %607 = vmatpush1.xpose.msra.mxu0 0.0
        %608 = vmatprep.subr.mxu0 0.0
        %609 = vmatpush1.xpose.msra.mxu0 0.0
        %610 = vmatprep.subr.mxu0 0.0
        %611 = vmatpush1.xpose.msra.mxu0 0.0
        %612 = vmatprep.subr.mxu0 0.0
        %613 = vmatpush1.xpose.msra.mxu0 0.0
        %614 = vmatprep.subr.mxu0 0.0
        %615 = vmatpush1.xpose.msra.mxu0 0.0
        %616 = vmatprep.subr.mxu0 0.0
        %617 = vmatpush1.xpose.msra.mxu0 0.0
        %618 = vmatprep.subr.mxu0 0.0
        %619 = vmatpush1.xpose.msra.mxu0 0.0
        %620 = vmatprep.subr.mxu0 0.0
        %621 = vmatpush1.xpose.msra.mxu0 0.0
        %622 = vmatprep.subr.mxu0 0.0
        %623 = vmatpush1.xpose.msra.mxu0 0.0
        %624 = vmatprep.subr.mxu0 0.0
        %625 = vmatpush1.xpose.msra.mxu0 0.0
        %626 = vmatprep.subr.mxu0 0.0
        %627 = vmatpush1.xpose.msra.mxu0 0.0
        %628 = vmatprep.subr.mxu0 0.0
        %629 = vmatpush1.xpose.msra.mxu0 0.0
        %630 = vmatprep.subr.mxu0 0.0
        %631 = vmatpush1.xpose.msra.mxu0 0.0
        %632 = vmatprep.subr.mxu0 0.0
        %633 = vmatpush1.xpose.msra.mxu0 0.0
        %634 = vmatprep.subr.mxu0 0.0
        %635 = vmatpush1.xpose.msra.mxu0 0.0
        %636 = vmatprep.subr.mxu0 0.0
        %637 = vmatpush1.xpose.msra.mxu0 0.0
        %638 = vmatprep.subr.mxu0 0.0
        %639 = vmatpush1.xpose.msra.mxu0 0.0
        %640 = vmatprep.subr.mxu0 0.0
        %641 = vmatpush1.xpose.msra.mxu0 0.0
        %642 = vmatprep.subr.mxu0 0.0
        %643 = vmatpush1.xpose.msra.mxu0 0.0
        %644 = vmatprep.subr.mxu0 0.0
        %645 = vmatpush1.xpose.msra.mxu0 0.0
        %646 = vmatprep.subr.mxu0 0.0
        %647 = vmatpush1.xpose.msra.mxu0 0.0
        %648 = vmatprep.mubr.f32.mxu0 0.0
        %v649 = vand.u32 %v261, 4294901760
        %650 = vmatmul.mubr.f32.gmra.mrb[0].mxu0 %v649
        %v651 = vpop.f32.mrb[0].mxu0
        %v652 = vadd.f32 %v575, %v651
        %v653 = vpop.f32.mrb[0].mxu0
        %654 = vdwg.mxu0
        %655 = vmatprep.subr.mxu0 0.0
        %v656 = vand.u32 %v264, 4294901760
        %657 = vmatpush1.xpose.msra.mxu0 %v656
        %658 = vmatprep.subr.mxu0 0.0
        %v659 = vand.u32 %v267, 4294901760
        %660 = vmatpush1.xpose.msra.mxu0 %v659
        %661 = vmatprep.subr.mxu0 0.0
        %662 = vmatpush1.xpose.msra.mxu0 0.0
        %663 = vmatprep.subr.mxu0 0.0
        %664 = vmatpush1.xpose.msra.mxu0 0.0
        %665 = vmatprep.subr.mxu0 0.0
        %666 = vmatpush1.xpose.msra.mxu0 0.0
        %667 = vmatprep.subr.mxu0 0.0
        %668 = vmatpush1.xpose.msra.mxu0 0.0
        %669 = vmatprep.subr.mxu0 0.0
        %670 = vmatpush1.xpose.msra.mxu0 0.0
        %671 = vmatprep.subr.mxu0 0.0
        %672 = vmatpush1.xpose.msra.mxu0 0.0
        %673 = vmatprep.subr.mxu0 0.0
        %674 = vmatpush1.xpose.msra.mxu0 0.0
        %675 = vmatprep.subr.mxu0 0.0
        %676 = vmatpush1.xpose.msra.mxu0 0.0
        %677 = vmatprep.subr.mxu0 0.0
        %678 = vmatpush1.xpose.msra.mxu0 0.0
        %679 = vmatprep.subr.mxu0 0.0
        %680 = vmatpush1.xpose.msra.mxu0 0.0
        %681 = vmatprep.subr.mxu0 0.0
        %682 = vmatpush1.xpose.msra.mxu0 0.0
        %683 = vmatprep.subr.mxu0 0.0
        %684 = vmatpush1.xpose.msra.mxu0 0.0
        %685 = vmatprep.subr.mxu0 0.0
        %686 = vmatpush1.xpose.msra.mxu0 0.0
        %687 = vmatprep.subr.mxu0 0.0
        %688 = vmatpush1.xpose.msra.mxu0 0.0
        %689 = vmatprep.subr.mxu0 0.0
        %690 = vmatpush1.xpose.msra.mxu0 0.0
        %691 = vmatprep.subr.mxu0 0.0
        %692 = vmatpush1.xpose.msra.mxu0 0.0
        %693 = vmatprep.subr.mxu0 0.0
        %694 = vmatpush1.xpose.msra.mxu0 0.0
        %695 = vmatprep.subr.mxu0 0.0
        %696 = vmatpush1.xpose.msra.mxu0 0.0
        %697 = vmatprep.subr.mxu0 0.0
        %698 = vmatpush1.xpose.msra.mxu0 0.0
        %699 = vmatprep.subr.mxu0 0.0
        %700 = vmatpush1.xpose.msra.mxu0 0.0
        %701 = vmatprep.subr.mxu0 0.0
        %702 = vmatpush1.xpose.msra.mxu0 0.0
        %703 = vmatprep.subr.mxu0 0.0
        %704 = vmatpush1.xpose.msra.mxu0 0.0
        %705 = vmatprep.subr.mxu0 0.0
        %706 = vmatpush1.xpose.msra.mxu0 0.0
        %707 = vmatprep.subr.mxu0 0.0
        %708 = vmatpush1.xpose.msra.mxu0 0.0
        %709 = vmatprep.subr.mxu0 0.0
        %710 = vmatpush1.xpose.msra.mxu0 0.0
        %711 = vmatprep.subr.mxu0 0.0
        %712 = vmatpush1.xpose.msra.mxu0 0.0
        %713 = vmatprep.subr.mxu0 0.0
        %714 = vmatpush1.xpose.msra.mxu0 0.0
        %715 = vmatprep.subr.mxu0 0.0
        %716 = vmatpush1.xpose.msra.mxu0 0.0
        %717 = vmatprep.subr.mxu0 0.0
        %718 = vmatpush1.xpose.msra.mxu0 0.0
        %719 = vmatprep.subr.mxu0 0.0
        %720 = vmatpush1.xpose.msra.mxu0 0.0
        %721 = vmatprep.mubr.f32.mxu0 0.0
        %v722 = vand.u32 %v261, 4294901760
        %723 = vmatmul.mubr.f32.gmra.mrb[0].mxu0 %v722
        %v724 = vpop.f32.mrb[0].mxu0
        %v725 = vadd.f32 %v652, %v724
        %v726 = vpop.f32.mrb[0].mxu0
        %727 = vdwg.mxu0
        %vm728 = vcmask 130048
        %v729 = vsel %vm728, %v725, -inf
        %730 = vmax.xlane.f32.xlu0 %v729
        %v731 = vpop.xlane.xlu0 %730
        %v732 = vsub.f32 %v725, %v731
        %v733 = vmul.f32 %v732, 1.442695
        %v734 = vpow.pop %v733
        %v735 = vsel %vm728, %v734, 0.0
        %736 = vadd.xlane.f32.xlu0 %v735
        %v737 = vpop.xlane.xlu0 %736
        %v738 = vrcp.pop %v737
        %v739 = vmul.f32 %v734, %v738
        %740 = vst.msk [vmem:[%s255] sm:$0xff] %vm728, %v739
        %v742 = vsel %vm728, %v739, 0
        %744 = vmatprep.subr.mxu0 0.0
        %v745 = vand.u32 %v257, 4294901760
        %746 = vmatpush1.msra.mxu0 %v745
        %747 = vmatprep.subr.mxu0 0.0
        %v748 = vand.u32 %v258, 4294901760
        %749 = vmatpush1.msra.mxu0 %v748
        %750 = vmatprep.subr.mxu0 0.0
        %751 = vmatpush1.msra.mxu0 0.0
        %752 = vmatprep.subr.mxu0 0.0
        %753 = vmatpush1.msra.mxu0 0.0
        %754 = vmatprep.subr.mxu0 0.0
        %755 = vmatpush1.msra.mxu0 0.0
        %756 = vmatprep.subr.mxu0 0.0
        %757 = vmatpush1.msra.mxu0 0.0
        %758 = vmatprep.subr.mxu0 0.0
        %759 = vmatpush1.msra.mxu0 0.0
        %760 = vmatprep.subr.mxu0 0.0
        %761 = vmatpush1.msra.mxu0 0.0
        %762 = vmatprep.subr.mxu0 0.0
        %763 = vmatpush1.msra.mxu0 0.0
        %764 = vmatprep.subr.mxu0 0.0
        %765 = vmatpush1.msra.mxu0 0.0
        %766 = vmatprep.subr.mxu0 0.0
        %767 = vmatpush1.msra.mxu0 0.0
        %768 = vmatprep.subr.mxu0 0.0
        %769 = vmatpush1.msra.mxu0 0.0
        %770 = vmatprep.subr.mxu0 0.0
        %771 = vmatpush1.msra.mxu0 0.0
        %772 = vmatprep.subr.mxu0 0.0
        %773 = vmatpush1.msra.mxu0 0.0
        %774 = vmatprep.subr.mxu0 0.0
        %775 = vmatpush1.msra.mxu0 0.0
        %776 = vmatprep.subr.mxu0 0.0
        %777 = vmatpush1.msra.mxu0 0.0
        %778 = vmatprep.subr.mxu0 0.0
        %779 = vmatpush1.msra.mxu0 0.0
        %780 = vmatprep.subr.mxu0 0.0
        %781 = vmatpush1.msra.mxu0 0.0
        %782 = vmatprep.subr.mxu0 0.0
        %783 = vmatpush1.msra.mxu0 0.0
        %784 = vmatprep.subr.mxu0 0.0
        %785 = vmatpush1.msra.mxu0 0.0
        %786 = vmatprep.subr.mxu0 0.0
        %787 = vmatpush1.msra.mxu0 0.0
        %788 = vmatprep.subr.mxu0 0.0
        %789 = vmatpush1.msra.mxu0 0.0
        %790 = vmatprep.subr.mxu0 0.0
        %791 = vmatpush1.msra.mxu0 0.0
        %792 = vmatprep.subr.mxu0 0.0
        %793 = vmatpush1.msra.mxu0 0.0
        %794 = vmatprep.subr.mxu0 0.0
        %795 = vmatpush1.msra.mxu0 0.0
        %796 = vmatprep.subr.mxu0 0.0
        %797 = vmatpush1.msra.mxu0 0.0
        %798 = vmatprep.subr.mxu0 0.0
        %799 = vmatpush1.msra.mxu0 0.0
        %800 = vmatprep.subr.mxu0 0.0
        %801 = vmatpush1.msra.mxu0 0.0
        %802 = vmatprep.subr.mxu0 0.0
        %803 = vmatpush1.msra.mxu0 0.0
        %804 = vmatprep.subr.mxu0 0.0
        %805 = vmatpush1.msra.mxu0 0.0
        %806 = vmatprep.subr.mxu0 0.0
        %807 = vmatpush1.msra.mxu0 0.0
        %808 = vmatprep.subr.mxu0 0.0
        %809 = vmatpush1.msra.mxu0 0.0
        %810 = vmatprep.mubr.f32.mxu0 0.0
        %v811 = vand.u32 %v742, 4294901760
        %v812 = vsub.f32 %v742, %v811
        %v813 = vand.u32 %v812, 4294901760
        %v814 = vsub.f32 %v812, %v813
        %v815 = vand.u32 %v814, 4294901760
        %816 = vmatmul.mubr.f32.gmra.mrb[0].mxu0 %v815
        %v817 = vpop.f32.mrb[0].mxu0
        %v818 = vadd.f32 0.0, %v817
        %v819 = vpop.f32.mrb[0].mxu0
        %820 = vdwg.mxu0
        %821 = vmatprep.subr.mxu0 0.0
        %v822 = vand.u32 %v257, 4294901760
        %v823 = vsub.f32 %v257, %v822
        %v824 = vand.u32 %v823, 4294901760
        %v825 = vsub.f32 %v823, %v824
        %v826 = vand.u32 %v825, 4294901760
        %827 = vmatpush1.msra.mxu0 %v826
        %828 = vmatprep.subr.mxu0 0.0
        %v829 = vand.u32 %v258, 4294901760
        %v830 = vsub.f32 %v258, %v829
        %v831 = vand.u32 %v830, 4294901760
        %v832 = vsub.f32 %v830, %v831
        %v833 = vand.u32 %v832, 4294901760
        %834 = vmatpush1.msra.mxu0 %v833
        %835 = vmatprep.subr.mxu0 0.0
        %836 = vmatpush1.msra.mxu0 0.0
        %837 = vmatprep.subr.mxu0 0.0
        %838 = vmatpush1.msra.mxu0 0.0
        %839 = vmatprep.subr.mxu0 0.0
        %840 = vmatpush1.msra.mxu0 0.0
        %841 = vmatprep.subr.mxu0 0.0
        %842 = vmatpush1.msra.mxu0 0.0
        %843 = vmatprep.subr.mxu0 0.0
        %844 = vmatpush1.msra.mxu0 0.0
        %845 = vmatprep.subr.mxu0 0.0
        %846 = vmatpush1.msra.mxu0 0.0
        %847 = vmatprep.subr.mxu0 0.0
        %848 = vmatpush1.msra.mxu0 0.0
        %849 = vmatprep.subr.mxu0 0.0
        %850 = vmatpush1.msra.mxu0 0.0
        %851 = vmatprep.subr.mxu0 0.0
        %852 = vmatpush1.msra.mxu0 0.0
        %853 = vmatprep.subr.mxu0 0.0
        %854 = vmatpush1.msra.mxu0 0.0
        %855 = vmatprep.subr.mxu0 0.0
        %856 = vmatpush1.msra.mxu0 0.0
        %857 = vmatprep.subr.mxu0 0.0
        %858 = vmatpush1.msra.mxu0 0.0
        %859 = vmatprep.subr.mxu0 0.0
        %860 = vmatpush1.msra.mxu0 0.0
        %861 = vmatprep.subr.mxu0 0.0
        %862 = vmatpush1.msra.mxu0 0.0
        %863 = vmatprep.subr.mxu0 0.0
        %864 = vmatpush1.msra.mxu0 0.0
        %865 = vmatprep.subr.mxu0 0.0
        %866 = vmatpush1.msra.mxu0 0.0
        %867 = vmatprep.subr.mxu0 0.0
        %868 = vmatpush1.msra.mxu0 0.0
        %869 = vmatprep.subr.mxu0 0.0
        %870 = vmatpush1.msra.mxu0 0.0
        %871 = vmatprep.subr.mxu0 0.0
        %872 = vmatpush1.msra.mxu0 0.0
        %873 = vmatprep.subr.mxu0 0.0
        %874 = vmatpush1.msra.mxu0 0.0
        %875 = vmatprep.subr.mxu0 0.0
        %876 = vmatpush1.msra.mxu0 0.0
        %877 = vmatprep.subr.mxu0 0.0
        %878 = vmatpush1.msra.mxu0 0.0
        %879 = vmatprep.subr.mxu0 0.0
        %880 = vmatpush1.msra.mxu0 0.0
        %881 = vmatprep.subr.mxu0 0.0
        %882 = vmatpush1.msra.mxu0 0.0
        %883 = vmatprep.subr.mxu0 0.0
        %884 = vmatpush1.msra.mxu0 0.0
        %885 = vmatprep.subr.mxu0 0.0
        %886 = vmatpush1.msra.mxu0 0.0
        %887 = vmatprep.subr.mxu0 0.0
        %888 = vmatpush1.msra.mxu0 0.0
        %889 = vmatprep.subr.mxu0 0.0
        %890 = vmatpush1.msra.mxu0 0.0
        %891 = vmatprep.subr.mxu0 0.0
        %892 = vmatpush1.msra.mxu0 0.0
        %893 = vmatprep.subr.mxu0 0.0
        %894 = vmatpush1.msra.mxu0 0.0
        %895 = vmatprep.mubr.f32.mxu0 0.0
        %v896 = vand.u32 %v742, 4294901760
        %897 = vmatmul.mubr.f32.gmra.mrb[0].mxu0 %v896
        %v898 = vpop.f32.mrb[0].mxu0
        %v899 = vadd.f32 %v818, %v898
        %v900 = vpop.f32.mrb[0].mxu0
        %901 = vdwg.mxu0
        %902 = vmatprep.subr.mxu0 0.0
        %v903 = vand.u32 %v257, 4294901760
        %v904 = vsub.f32 %v257, %v903
        %905 = vmatpush1.msra.mxu0 %v904
        %906 = vmatprep.subr.mxu0 0.0
        %v907 = vand.u32 %v258, 4294901760
        %v908 = vsub.f32 %v258, %v907
        %909 = vmatpush1.msra.mxu0 %v908
        %910 = vmatprep.subr.mxu0 0.0
        %911 = vmatpush1.msra.mxu0 0.0
        %912 = vmatprep.subr.mxu0 0.0
        %913 = vmatpush1.msra.mxu0 0.0
        %914 = vmatprep.subr.mxu0 0.0
        %915 = vmatpush1.msra.mxu0 0.0
        %916 = vmatprep.subr.mxu0 0.0
        %917 = vmatpush1.msra.mxu0 0.0
        %918 = vmatprep.subr.mxu0 0.0
        %919 = vmatpush1.msra.mxu0 0.0
        %920 = vmatprep.subr.mxu0 0.0
        %921 = vmatpush1.msra.mxu0 0.0
        %922 = vmatprep.subr.mxu0 0.0
        %923 = vmatpush1.msra.mxu0 0.0
        %924 = vmatprep.subr.mxu0 0.0
        %925 = vmatpush1.msra.mxu0 0.0
        %926 = vmatprep.subr.mxu0 0.0
        %927 = vmatpush1.msra.mxu0 0.0
        %928 = vmatprep.subr.mxu0 0.0
        %929 = vmatpush1.msra.mxu0 0.0
        %930 = vmatprep.subr.mxu0 0.0
        %931 = vmatpush1.msra.mxu0 0.0
        %932 = vmatprep.subr.mxu0 0.0
        %933 = vmatpush1.msra.mxu0 0.0
        %934 = vmatprep.subr.mxu0 0.0
        %935 = vmatpush1.msra.mxu0 0.0
        %936 = vmatprep.subr.mxu0 0.0
        %937 = vmatpush1.msra.mxu0 0.0
        %938 = vmatprep.subr.mxu0 0.0
        %939 = vmatpush1.msra.mxu0 0.0
        %940 = vmatprep.subr.mxu0 0.0
        %941 = vmatpush1.msra.mxu0 0.0
        %942 = vmatprep.subr.mxu0 0.0
        %943 = vmatpush1.msra.mxu0 0.0
        %944 = vmatprep.subr.mxu0 0.0
        %945 = vmatpush1.msra.mxu0 0.0
        %946 = vmatprep.subr.mxu0 0.0
        %947 = vmatpush1.msra.mxu0 0.0
        %948 = vmatprep.subr.mxu0 0.0
        %949 = vmatpush1.msra.mxu0 0.0
        %950 = vmatprep.subr.mxu0 0.0
        %951 = vmatpush1.msra.mxu0 0.0
        %952 = vmatprep.subr.mxu0 0.0
        %953 = vmatpush1.msra.mxu0 0.0
        %954 = vmatprep.subr.mxu0 0.0
        %955 = vmatpush1.msra.mxu0 0.0
        %956 = vmatprep.subr.mxu0 0.0
        %957 = vmatpush1.msra.mxu0 0.0
        %958 = vmatprep.subr.mxu0 0.0
        %959 = vmatpush1.msra.mxu0 0.0
        %960 = vmatprep.subr.mxu0 0.0
        %961 = vmatpush1.msra.mxu0 0.0
        %962 = vmatprep.subr.mxu0 0.0
        %963 = vmatpush1.msra.mxu0 0.0
        %964 = vmatprep.subr.mxu0 0.0
        %965 = vmatpush1.msra.mxu0 0.0
        %966 = vmatprep.subr.mxu0 0.0
        %967 = vmatpush1.msra.mxu0 0.0
        %968 = vmatprep.subr.mxu0 0.0
        %969 = vmatpush1.msra.mxu0 0.0
        %970 = vmatprep.mubr.f32.mxu0 0.0
        %v971 = vand.u32 %v742, 4294901760
        %v972 = vsub.f32 %v742, %v971
        %973 = vmatmul.mubr.f32.gmra.mrb[0].mxu0 %v972
        %v974 = vpop.f32.mrb[0].mxu0
        %v975 = vadd.f32 %v899, %v974
        %v976 = vpop.f32.mrb[0].mxu0
        %977 = vdwg.mxu0
        %978 = vmatprep.subr.mxu0 0.0
        %v979 = vand.u32 %v257, 4294901760
        %980 = vmatpush1.msra.mxu0 %v979
        %981 = vmatprep.subr.mxu0 0.0
        %v982 = vand.u32 %v258, 4294901760
        %983 = vmatpush1.msra.mxu0 %v982
        %984 = vmatprep.subr.mxu0 0.0
        %985 = vmatpush1.msra.mxu0 0.0
        %986 = vmatprep.subr.mxu0 0.0
        %987 = vmatpush1.msra.mxu0 0.0
        %988 = vmatprep.subr.mxu0 0.0
        %989 = vmatpush1.msra.mxu0 0.0
        %990 = vmatprep.subr.mxu0 0.0
        %991 = vmatpush1.msra.mxu0 0.0
        %992 = vmatprep.subr.mxu0 0.0
        %993 = vmatpush1.msra.mxu0 0.0
        %994 = vmatprep.subr.mxu0 0.0
        %995 = vmatpush1.msra.mxu0 0.0
        %996 = vmatprep.subr.mxu0 0.0
        %997 = vmatpush1.msra.mxu0 0.0
        %998 = vmatprep.subr.mxu0 0.0
        %999 = vmatpush1.msra.mxu0 0.0
        %1000 = vmatprep.subr.mxu0 0.0
        %1001 = vmatpush1.msra.mxu0 0.0
        %1002 = vmatprep.subr.mxu0 0.0
        %1003 = vmatpush1.msra.mxu0 0.0
        %1004 = vmatprep.subr.mxu0 0.0
        %1005 = vmatpush1.msra.mxu0 0.0
        %1006 = vmatprep.subr.mxu0 0.0
        %1007 = vmatpush1.msra.mxu0 0.0
        %1008 = vmatprep.subr.mxu0 0.0
        %1009 = vmatpush1.msra.mxu0 0.0
        %1010 = vmatprep.subr.mxu0 0.0
        %1011 = vmatpush1.msra.mxu0 0.0
        %1012 = vmatprep.subr.mxu0 0.0
        %1013 = vmatpush1.msra.mxu0 0.0
        %1014 = vmatprep.subr.mxu0 0.0
        %1015 = vmatpush1.msra.mxu0 0.0
        %1016 = vmatprep.subr.mxu0 0.0
        %1017 = vmatpush1.msra.mxu0 0.0
        %1018 = vmatprep.subr.mxu0 0.0
        %1019 = vmatpush1.msra.mxu0 0.0
        %1020 = vmatprep.subr.mxu0 0.0
        %1021 = vmatpush1.msra.mxu0 0.0
        %1022 = vmatprep.subr.mxu0 0.0
        %1023 = vmatpush1.msra.mxu0 0.0
        %1024 = vmatprep.subr.mxu0 0.0
        %1025 = vmatpush1.msra.mxu0 0.0
        %1026 = vmatprep.subr.mxu0 0.0
        %1027 = vmatpush1.msra.mxu0 0.0
        %1028 = vmatprep.subr.mxu0 0.0
        %1029 = vmatpush1.msra.mxu0 0.0
        %1030 = vmatprep.subr.mxu0 0.0
        %1031 = vmatpush1.msra.mxu0 0.0
        %1032 = vmatprep.subr.mxu0 0.0
        %1033 = vmatpush1.msra.mxu0 0.0
        %1034 = vmatprep.subr.mxu0 0.0
        %1035 = vmatpush1.msra.mxu0 0.0
        %1036 = vmatprep.subr.mxu0 0.0
        %1037 = vmatpush1.msra.mxu0 0.0
        %1038 = vmatprep.subr.mxu0 0.0
        %1039 = vmatpush1.msra.mxu0 0.0
        %1040 = vmatprep.subr.mxu0 0.0
        %1041 = vmatpush1.msra.mxu0 0.0
        %1042 = vmatprep.subr.mxu0 0.0
        %1043 = vmatpush1.msra.mxu0 0.0
        %1044 = vmatprep.mubr.f32.mxu0 0.0
        %v1045 = vand.u32 %v742, 4294901760
        %v1046 = vsub.f32 %v742, %v1045
        %v1047 = vand.u32 %v1046, 4294901760
        %1048 = vmatmul.mubr.f32.gmra.mrb[0].mxu0 %v1047
        %v1049 = vpop.f32.mrb[0].mxu0
        %v1050 = vadd.f32 %v975, %v1049
        %v1051 = vpop.f32.mrb[0].mxu0
        %1052 = vdwg.mxu0
        %1053 = vmatprep.subr.mxu0 0.0
        %v1054 = vand.u32 %v257, 4294901760
        %v1055 = vsub.f32 %v257, %v1054
        %v1056 = vand.u32 %v1055, 4294901760
        %1057 = vmatpush1.msra.mxu0 %v1056
        %1058 = vmatprep.subr.mxu0 0.0
        %v1059 = vand.u32 %v258, 4294901760
        %v1060 = vsub.f32 %v258, %v1059
        %v1061 = vand.u32 %v1060, 4294901760
        %1062 = vmatpush1.msra.mxu0 %v1061
        %1063 = vmatprep.subr.mxu0 0.0
        %1064 = vmatpush1.msra.mxu0 0.0
        %1065 = vmatprep.subr.mxu0 0.0
        %1066 = vmatpush1.msra.mxu0 0.0
        %1067 = vmatprep.subr.mxu0 0.0
        %1068 = vmatpush1.msra.mxu0 0.0
        %1069 = vmatprep.subr.mxu0 0.0
        %1070 = vmatpush1.msra.mxu0 0.0
        %1071 = vmatprep.subr.mxu0 0.0
        %1072 = vmatpush1.msra.mxu0 0.0
        %1073 = vmatprep.subr.mxu0 0.0
        %1074 = vmatpush1.msra.mxu0 0.0
        %1075 = vmatprep.subr.mxu0 0.0
        %1076 = vmatpush1.msra.mxu0 0.0
        %1077 = vmatprep.subr.mxu0 0.0
        %1078 = vmatpush1.msra.mxu0 0.0
        %1079 = vmatprep.subr.mxu0 0.0
        %1080 = vmatpush1.msra.mxu0 0.0
        %1081 = vmatprep.subr.mxu0 0.0
        %1082 = vmatpush1.msra.mxu0 0.0
        %1083 = vmatprep.subr.mxu0 0.0
        %1084 = vmatpush1.msra.mxu0 0.0
        %1085 = vmatprep.subr.mxu0 0.0
        %1086 = vmatpush1.msra.mxu0 0.0
        %1087 = vmatprep.subr.mxu0 0.0
        %1088 = vmatpush1.msra.mxu0 0.0
        %1089 = vmatprep.subr.mxu0 0.0
        %1090 = vmatpush1.msra.mxu0 0.0
        %1091 = vmatprep.subr.mxu0 0.0
        %1092 = vmatpush1.msra.mxu0 0.0
        %1093 = vmatprep.subr.mxu0 0.0
        %1094 = vmatpush1.msra.mxu0 0.0
        %1095 = vmatprep.subr.mxu0 0.0
        %1096 = vmatpush1.msra.mxu0 0.0
        %1097 = vmatprep.subr.mxu0 0.0
        %1098 = vmatpush1.msra.mxu0 0.0
        %1099 = vmatprep.subr.mxu0 0.0
        %1100 = vmatpush1.msra.mxu0 0.0
        %1101 = vmatprep.subr.mxu0 0.0
        %1102 = vmatpush1.msra.mxu0 0.0
        %1103 = vmatprep.subr.mxu0 0.0
        %1104 = vmatpush1.msra.mxu0 0.0
        %1105 = vmatprep.subr.mxu0 0.0
        %1106 = vmatpush1.msra.mxu0 0.0
        %1107 = vmatprep.subr.mxu0 0.0
        %1108 = vmatpush1.msra.mxu0 0.0
        %1109 = vmatprep.subr.mxu0 0.0
        %1110 = vmatpush1.msra.mxu0 0.0
        %1111 = vmatprep.subr.mxu0 0.0
        %1112 = vmatpush1.msra.mxu0 0.0
        %1113 = vmatprep.subr.mxu0 0.0
        %1114 = vmatpush1.msra.mxu0 0.0
        %1115 = vmatprep.subr.mxu0 0.0
        %1116 = vmatpush1.msra.mxu0 0.0
        %1117 = vmatprep.subr.mxu0 0.0
        %1118 = vmatpush1.msra.mxu0 0.0
        %1119 = vmatprep.subr.mxu0 0.0
        %1120 = vmatpush1.msra.mxu0 0.0
        %1121 = vmatprep.subr.mxu0 0.0
        %1122 = vmatpush1.msra.mxu0 0.0
        %1123 = vmatprep.mubr.f32.mxu0 0.0
        %v1124 = vand.u32 %v742, 4294901760
        %1125 = vmatmul.mubr.f32.gmra.mrb[0].mxu0 %v1124
        %v1126 = vpop.f32.mrb[0].mxu0
        %v1127 = vadd.f32 %v1050, %v1126
        %v1128 = vpop.f32.mrb[0].mxu0
        %1129 = vdwg.mxu0
        %1130 = vmatprep.subr.mxu0 0.0
        %v1131 = vand.u32 %v257, 4294901760
        %1132 = vmatpush1.msra.mxu0 %v1131
        %1133 = vmatprep.subr.mxu0 0.0
        %v1134 = vand.u32 %v258, 4294901760
        %1135 = vmatpush1.msra.mxu0 %v1134
        %1136 = vmatprep.subr.mxu0 0.0
        %1137 = vmatpush1.msra.mxu0 0.0
        %1138 = vmatprep.subr.mxu0 0.0
        %1139 = vmatpush1.msra.mxu0 0.0
        %1140 = vmatprep.subr.mxu0 0.0
        %1141 = vmatpush1.msra.mxu0 0.0
        %1142 = vmatprep.subr.mxu0 0.0
        %1143 = vmatpush1.msra.mxu0 0.0
        %1144 = vmatprep.subr.mxu0 0.0
        %1145 = vmatpush1.msra.mxu0 0.0
        %1146 = vmatprep.subr.mxu0 0.0
        %1147 = vmatpush1.msra.mxu0 0.0
        %1148 = vmatprep.subr.mxu0 0.0
        %1149 = vmatpush1.msra.mxu0 0.0
        %1150 = vmatprep.subr.mxu0 0.0
        %1151 = vmatpush1.msra.mxu0 0.0
        %1152 = vmatprep.subr.mxu0 0.0
        %1153 = vmatpush1.msra.mxu0 0.0
        %1154 = vmatprep.subr.mxu0 0.0
        %1155 = vmatpush1.msra.mxu0 0.0
        %1156 = vmatprep.subr.mxu0 0.0
        %1157 = vmatpush1.msra.mxu0 0.0
        %1158 = vmatprep.subr.mxu0 0.0
        %1159 = vmatpush1.msra.mxu0 0.0
        %1160 = vmatprep.subr.mxu0 0.0
        %1161 = vmatpush1.msra.mxu0 0.0
        %1162 = vmatprep.subr.mxu0 0.0
        %1163 = vmatpush1.msra.mxu0 0.0
        %1164 = vmatprep.subr.mxu0 0.0
        %1165 = vmatpush1.msra.mxu0 0.0
        %1166 = vmatprep.subr.mxu0 0.0
        %1167 = vmatpush1.msra.mxu0 0.0
        %1168 = vmatprep.subr.mxu0 0.0
        %1169 = vmatpush1.msra.mxu0 0.0
        %1170 = vmatprep.subr.mxu0 0.0
        %1171 = vmatpush1.msra.mxu0 0.0
        %1172 = vmatprep.subr.mxu0 0.0
        %1173 = vmatpush1.msra.mxu0 0.0
        %1174 = vmatprep.subr.mxu0 0.0
        %1175 = vmatpush1.msra.mxu0 0.0
        %1176 = vmatprep.subr.mxu0 0.0
        %1177 = vmatpush1.msra.mxu0 0.0
        %1178 = vmatprep.subr.mxu0 0.0
        %1179 = vmatpush1.msra.mxu0 0.0
        %1180 = vmatprep.subr.mxu0 0.0
        %1181 = vmatpush1.msra.mxu0 0.0
        %1182 = vmatprep.subr.mxu0 0.0
        %1183 = vmatpush1.msra.mxu0 0.0
        %1184 = vmatprep.subr.mxu0 0.0
        %1185 = vmatpush1.msra.mxu0 0.0
        %1186 = vmatprep.subr.mxu0 0.0
        %1187 = vmatpush1.msra.mxu0 0.0
        %1188 = vmatprep.subr.mxu0 0.0
        %1189 = vmatpush1.msra.mxu0 0.0
        %1190 = vmatprep.subr.mxu0 0.0
        %1191 = vmatpush1.msra.mxu0 0.0
        %1192 = vmatprep.subr.mxu0 0.0
        %1193 = vmatpush1.msra.mxu0 0.0
        %1194 = vmatprep.subr.mxu0 0.0
        %1195 = vmatpush1.msra.mxu0 0.0
        %1196 = vmatprep.mubr.f32.mxu0 0.0
        %v1197 = vand.u32 %v742, 4294901760
        %1198 = vmatmul.mubr.f32.gmra.mrb[0].mxu0 %v1197
        %v1199 = vpop.f32.mrb[0].mxu0
        %v1200 = vadd.f32 %v1127, %v1199
        %v1201 = vpop.f32.mrb[0].mxu0
        %1202 = vdwg.mxu0
        %1203 = vst.msk [vmem:[%s248] sm:$0xff] %vm259, %v1200
        %s1204 = sand.u32 %s103, 1
        %s1205 = scalar_lea.sflag [#allocation4], %s1204
        %s1206 = sand.u32 %s103, 1
        %s1207 = smul.addr %s1206, 8
        %s1208 = scalar_lea.vmem [#allocation7], %s1207
        %s1209 = sand.u32 %s131, 1
        %s1210 = scalar_lea.sflag [#allocation9], %s1209
        %s1211 = sand.u32 %s131, 1
        %s1212 = smul.addr %s1211, 8
        %s1213 = scalar_lea.vmem [#allocation8], %s1212
        // Predicated region
        $region37: #{tpu_custom_call.1} parent=27 // pred_check
          %p1214 = pneg %p113
        $region38: #{tpu_custom_call.1} parent=27 // pred_check_branch
          %1216 = sbr.rel (%p1214) target = $region40
        $region39: #{tpu_custom_call.1} parent=27 // pred_region
          %s1218 = ssub.s32 128, 128
          %1219 = vsyncadd %s1205, %s1218
          %s1220 = sadd.s32 %s32, %s31
          %s1221 = smul.addr %s1220, 128
          %s1222 = scalar_lea.hbm %s2, %s1221
          %s1224 = sshll.u32 %s1208, 4
          %s1225 = int_to_ptr.vmem [resolvable:$true] %s1224
          %1227 = dma.vmem_to_hbm [thread:$0]  %s1225, 128, %s1222, %s1205
        $region40: #{tpu_custom_call.1} parent=27 // pred_fallthru
          _
        // Predicated region
        $region41: #{tpu_custom_call.1} parent=27 // pred_check
          %p1228 = pneg %p141
        $region42: #{tpu_custom_call.1} parent=27 // pred_check_branch
          %1230 = sbr.rel (%p1228) target = $region44
        $region43: #{tpu_custom_call.1} parent=27 // pred_region
          %s1232 = ssub.s32 128, 128
          %1233 = vsyncadd %s1210, %s1232
          %s1234 = sadd.s32 %s32, %s31
          %s1235 = smul.addr %s1234, 128
          %s1236 = scalar_lea.hbm %s3, %s1235
          %s1238 = sshll.u32 %s1213, 4
          %s1239 = int_to_ptr.vmem [resolvable:$true] %s1238
          %1241 = dma.vmem_to_hbm [thread:$0]  %s1239, 128, %s1236, %s1210
        $region44: #{tpu_custom_call.1} parent=27 // pred_fallthru
          _
      $region28: #{tpu_custom_call.1} parent=5 // pred_fallthru
        _
      %p1242 = scmp.le.s32.totalorder 2, %s22
      // Predicated region
      $region45: #{tpu_custom_call.1} parent=5 // pred_check
        %p1243 = pneg %p1242
      $region46: #{tpu_custom_call.1} parent=5 // pred_check_branch
        %1245 = sbr.rel (%p1243) target = $region48
      $region47: #{tpu_custom_call.1} parent=5 // pred_region
        %s1246 = ssub.s32 %s22, 2
        // Predicated region
        $region49: #{tpu_custom_call.1} parent=47 // pred_check
          %p1247 = pneg %p119
        $region50: #{tpu_custom_call.1} parent=47 // pred_check_branch
          %1249 = sbr.rel (%p1247) target = $region52
        $region51: #{tpu_custom_call.1} parent=47 // pred_region
          %s1250 = sand.u32 %s104, 1
          %s1251 = scalar_lea.sflag [#allocation4], %s1250
          %s1252 = sand.u32 %s104, 1
          %s1253 = smul.addr %s1252, 8
          %s1254 = scalar_lea.vmem [#allocation7], %s1253
          %1255 = dma.done %s1251, 128
        $region52: #{tpu_custom_call.1} parent=47 // pred_fallthru
          _
        // Predicated region
        $region53: #{tpu_custom_call.1} parent=47 // pred_check
          %p1256 = pneg %p147
        $region54: #{tpu_custom_call.1} parent=47 // pred_check_branch
          %1258 = sbr.rel (%p1256) target = $region56
        $region55: #{tpu_custom_call.1} parent=47 // pred_region
          %s1259 = sand.u32 %s132, 1
          %s1260 = scalar_lea.sflag [#allocation9], %s1259
          %s1261 = sand.u32 %s132, 1
          %s1262 = smul.addr %s1261, 8
          %s1263 = scalar_lea.vmem [#allocation8], %s1262
          %1264 = dma.done %s1260, 128
        $region56: #{tpu_custom_call.1} parent=47 // pred_fallthru
          _
      $region48: #{tpu_custom_call.1} parent=5 // pred_fallthru
        _
    $region6: #{tpu_custom_call.1} parent=1 // loop_footer
      %s26 = sadd.s32 1, %s22
    $region7: #{tpu_custom_call.1} parent=1 // loop_footer_branch
      %21 = sbr.rel target = $region3
    $region8: #{tpu_custom_call.1} parent=1 // loop_exit
      _
    %1265 = vsyncpa [#allocation3], 1
    %s1266 = scalar_lea.sflag [#allocation3], 1
    %1267 = vsyncpa %s1266, 1
    %1268 = vsyncpa [#allocation6], 1
    %s1269 = scalar_lea.sflag [#allocation6], 1
    %1270 = vsyncpa %s1269, 1
    %1271 = vsyncpa [#allocation4], 1
    %s1272 = scalar_lea.sflag [#allocation4], 1
    %1273 = vsyncpa %s1272, 1
    %1274 = vsyncpa [#allocation9], 1
    %s1275 = scalar_lea.sflag [#allocation9], 1
    %1276 = vsyncpa %s1275, 1

</llo_original>
